<compile_context>
chip_gen: v7x
topology: tpu7x:2x2x1
jax: 0.10.0
libtpu: 0.0.40
codegen_flags: <defaults>
</compile_context>

<pallas_src>
import math

import jax
import jax.numpy as jnp
from jax.experimental import pallas as pl
from jax.experimental.pallas import tpu as pltpu  # noqa: F401  (TPU backend; kept for tuning hooks)

# ----------------------------- small demo shapes ------------------------------
BATCH = 2
EMBED_CHANNELS = 32        # "hidden=32"


# ================================ Pallas kernel ================================

def _dense_film_kernel(x_ref, w_ref, b_ref, o_ref):
    """Fused Mish -> Linear(D, 2D) on a (B, D) slab.

    x: (B, D), w: (D, 2D), b: (1, 2D) -> o: (B, 2D)
    """
    x = x_ref[...]
    # Mish(x) = x * tanh(softplus(x)); softplus via numerically-stable logaddexp.
    h = x * jnp.tanh(jax.nn.softplus(x))
    # Single GEMM producing the full scale||shift slab (lane-dense 2D-wide store).
    o_ref[...] = (
        jnp.dot(h, w_ref[...], preferred_element_type=jnp.float32) + b_ref[...]
    )


def dense_film(position, w, b):
    """DenseFiLM.forward.

    position: (B, D) float32
    w:        (D, 2D) float32   (nn.Linear weight, already transposed to x@w form)
    b:        (2D,)   float32
    returns (scale, shift), each (B, 1, D)
    """
    B, D = position.shape
    out = pl.pallas_call(
        _dense_film_kernel,
        out_shape=jax.ShapeDtypeStruct((B, 2 * D), jnp.float32),
    )(position, w, b.reshape(1, 2 * D))

    # rearrange 'b c -> b 1 c' + chunk(2, dim=-1): pure view ops, done outside.
    pos_encoding = out[:, None, :]                     # (B, 1, 2D)
    scale = pos_encoding[..., :D]                      # (B, 1, D)
    shift = pos_encoding[..., D:]                      # (B, 1, D)
    return scale, shift


# ------------------------------ pure-JAX reference -----------------------------

def dense_film_ref(position, w, b):
    h = position * jnp.tanh(jax.nn.softplus(position))
    out = h @ w + b
    out = out[:, None, :]
    D = position.shape[-1]
    return out[..., :D], out[..., D:]


# ==================================== main =====================================

if __name__ == "__main__":
    key = jax.random.PRNGKey(0)
    kx, kw, kb = jax.random.split(key, 3)

    D = EMBED_CHANNELS
    position = jax.random.normal(kx, (BATCH, D), dtype=jnp.float32)

    # nn.Linear(D, 2D)-style init (uniform +-1/sqrt(D)), stored as (D, 2D) for x @ w.
    bound = 1.0 / math.sqrt(D)
    w = jax.random.uniform(kw, (D, 2 * D), minval=-bound, maxval=bound, dtype=jnp.float32)
    b = jax.random.uniform(kb, (2 * D,), minval=-bound, maxval=bound, dtype=jnp.float32)

    fwd = jax.jit(dense_film)
    scale, shift = fwd(position, w, b)
    scale, shift = jax.block_until_ready((scale, shift))

    assert scale.shape == (BATCH, 1, D)
    assert shift.shape == (BATCH, 1, D)
    assert bool(jnp.all(jnp.isfinite(scale))) and bool(jnp.all(jnp.isfinite(shift)))

    # Correctness against a pure-JAX reference.
    scale_ref, shift_ref = dense_film_ref(position, w, b)
    assert bool(jnp.allclose(scale, scale_ref, atol=1e-5, rtol=1e-5))
    assert bool(jnp.allclose(shift, shift_ref, atol=1e-5, rtol=1e-5))

    print("KERNEL_OK")
</pallas_src>

<mosaic_0001>
module attributes {stable_mosaic.version = 11 : i64} {
  func.func @_dense_film_kernel(%arg0: memref<2x32xf32, #tpu.memory_space<vmem>>, %arg1: memref<32x64xf32, #tpu.memory_space<vmem>>, %arg2: memref<1x64xf32, #tpu.memory_space<vmem>>, %arg3: memref<2x64xf32, #tpu.memory_space<vmem>>) attributes {dimension_semantics = [], scalar_prefetch = 0 : i64, scratch_operands = 0 : i64, tpu.core_type = #tpu.core_type<tc>} {
    %c0 = arith.constant 0 : index
    %c0_0 = arith.constant 0 : index
    %0 = vector.load %arg0[%c0, %c0_0] : memref<2x32xf32, #tpu.memory_space<vmem>>, vector<2x32xf32>
    %cst = arith.constant 0.000000e+00 : f32
    %1 = vector.broadcast %cst : f32 to vector<2x32xf32>
    %2 = arith.maximumf %0, %1 : vector<2x32xf32>
    %3 = vector.broadcast %cst : f32 to vector<2x32xf32>
    %4 = arith.subf %0, %3 : vector<2x32xf32>
    %5 = arith.cmpf one, %4, %4 : vector<2x32xf32>
    %6 = vector.broadcast %cst : f32 to vector<2x32xf32>
    %7 = arith.addf %0, %6 : vector<2x32xf32>
    %8 = math.absf %4 : vector<2x32xf32>
    %cst_1 = arith.constant 0.000000e+00 : f32
    %9 = vector.broadcast %cst_1 : f32 to vector<2x32xf32>
    %10 = arith.subf %9, %8 : vector<2x32xf32>
    %11 = math.exp %10 : vector<2x32xf32>
    %12 = math.log1p %11 : vector<2x32xf32>
    %13 = arith.addf %2, %12 : vector<2x32xf32>
    %14 = arith.select %5, %7, %13 : vector<2x32xi1>, vector<2x32xf32>
    %15 = math.tanh %14 : vector<2x32xf32>
    %16 = arith.mulf %0, %15 : vector<2x32xf32>
    %c0_2 = arith.constant 0 : index
    %c0_3 = arith.constant 0 : index
    %17 = vector.load %arg1[%c0_2, %c0_3] : memref<32x64xf32, #tpu.memory_space<vmem>>, vector<32x64xf32>
    %cst_4 = arith.constant dense<0.000000e+00> : vector<2x64xf32>
    %18 = tpu.matmul %16, %17, %cst_4 {dimension_numbers = #tpu.dot_dimension_numbers<[1], [0], [0], [1], [0, 0, 1, 1], [], []>} : vector<2x32xf32>, vector<32x64xf32>, vector<2x64xf32> -> vector<2x64xf32>
    %c0_5 = arith.constant 0 : index
    %c0_6 = arith.constant 0 : index
    %19 = vector.load %arg2[%c0_5, %c0_6] : memref<1x64xf32, #tpu.memory_space<vmem>>, vector<1x64xf32>
    %20 = vector.broadcast %19 : vector<1x64xf32> to vector<2x64xf32>
    %21 = arith.addf %18, %20 : vector<2x64xf32>
    %c0_7 = arith.constant 0 : index
    %c0_8 = arith.constant 0 : index
    %22 = vector.load %arg3[%c0_7, %c0_8] : memref<2x64xf32, #tpu.memory_space<vmem>>, vector<2x64xf32>
    tpu.vector_store %arg3[%c0_7, %c0_8], %21 {strides = array<i32>} : memref<2x64xf32, #tpu.memory_space<vmem>>, vector<2x64xf32>,
    return
  }
}

</mosaic_0001>

<llo_original>
// kernel: dense_film.1
$region0: #{dense_film.1}
  #allocation0 [shape = 'u32[]', space=smem, size = 0x4, offset = 0x4, fixed_abs, tag = 'smem constant byte address 0x4 - core index']
  #allocation1 [shape = 'u32[144,128]{1,0:T(1,128)}', space=vmem, size = 0x12000, scoped, tag = 'internal scratch']
  %s0 = inlined_call_operand.vmem [shape: f32[2,32], index: 0, kind: input, shape index: {}]
  %s1 = inlined_call_operand.hbm [shape: f32[32,64], index: 1, kind: input, shape index: {}]
  %s2 = inlined_call_operand.vmem [shape: f32[1,64], index: 2, kind: input, shape index: {}]
  %s3 = inlined_call_operand.vmem [shape: f32[2,64], index: 3, kind: output, shape index: {}]
  %s4 = sld [smem:[#allocation0]]
  $region26: #{dense_film.1} parent=0
    _
  %s6 = ssub.s32 1, %s4
  %s7 = scalar_select 0, %s6, %s4
  $region1: #{dense_film.1} parent=0
    #allocation2 [shape = 'u8[16384]{0}', space=vmem, size = 0x4000, scoped, tag = 'input window, operand 1, single buffered']
    #allocation3 [shape = 's32[1]{0}', space=sflag, size = 0x4, scoped, tag = 'scoped memory for dense_film.1']
    %8 = vsyncpa [#allocation3], 0
    // Predicated region
    $region2: #{dense_film.1} parent=1 // pred_check
      _
    $region3: #{dense_film.1} parent=1 // pred_check_branch
      %10 = sbr.rel (0) target = $region5
    $region4: #{dense_film.1} parent=1 // pred_region
      _
    $region5: #{dense_film.1} parent=1 // pred_fallthru
      _
    // Predicated region
    $region6: #{dense_film.1} parent=1 // pred_check
      _
    $region7: #{dense_film.1} parent=1 // pred_check_branch
      %12 = sbr.rel (0) target = $region9
    $region8: #{dense_film.1} parent=1 // pred_region
      %s14 = ssub.s32 512, 512
      %15 = vsyncadd [#allocation3], %s14
      %s16 = sshll.u32 [#allocation2], 4
      %s17 = int_to_ptr.vmem [resolvable:$true] %s16
      %22 = dma.hbm_to_vmem [thread:$0]  %s1, 512, %s17, [#allocation3], 128, 128, 8
    $region9: #{dense_film.1} parent=1 // pred_fallthru
      _
    // Predicated region
    $region10: #{dense_film.1} parent=1 // pred_check
      _
    $region11: #{dense_film.1} parent=1 // pred_check_branch
      %24 = sbr.rel (0) target = $region13
    $region12: #{dense_film.1} parent=1 // pred_region
      _
    $region13: #{dense_film.1} parent=1 // pred_fallthru
      _
    // Predicated region
    $region14: #{dense_film.1} parent=1 // pred_check
      _
    $region15: #{dense_film.1} parent=1 // pred_check_branch
      %26 = sbr.rel (0) target = $region17
    $region16: #{dense_film.1} parent=1 // pred_region
      %27 = dma.done [#allocation3], 512
    $region17: #{dense_film.1} parent=1 // pred_fallthru
      _
    %v28 = vld [vmem:[%s0] sm:$0x3]
    %v29 = vmax.f32 %v28, 0.0
    %vm30 = vcmp.ne.f32.partialorder %v28, %v28
    %v31 = vadd.f32 %v28, 0.0
    %v32 = vand.u32 2147483647, %v28
    %v33 = vsub.f32 0.0, %v32
    %v34 = vmul.f32 %v33, 1.442695
    %v35 = vpow.pop %v34
    %v36 = vadd.f32 %v35, 1.0
    %v37 = vlog2.pop %v36
    %v38 = vmul.f32 %v37, 0.6931472
    %v39 = vmul.f32 -0.5, %v35
    %v40 = vadd.f32 %v39, 1.0
    %v41 = vmul.f32 %v40, %v35
    %v42 = vand.u32 2147483647, %v35
    %vm43 = vcmp.lt.f32.partialorder %v42, 0.0004427343
    %v44 = vsel %vm43, %v41, %v38
    %v45 = vadd.f32 %v29, %v44
    %v46 = vsel %vm30, %v31, %v45
    %v47 = vtanh.pop %v46
    %v48 = vmul.f32 %v28, %v47
    %v49 = vld [vmem:[#allocation2] sm:$0xff]
    %v50 = vld [vmem:[#allocation2 + $0x8] sm:$0xff]
    %v51 = vld [vmem:[#allocation2 + $0x10] sm:$0xff]
    %v52 = vld [vmem:[#allocation2 + $0x18] sm:$0xff]
    %v53 = vld [vmem:[%s2] sm:$0x1]
    %v55 = vlaneseq
    %v56 = vshrl.u32 %v55, 7
    %v57 = vsub.s32 0, %v56
    %v58 = vrot.slane %v53, %v57
    %vm60 = vcmask 261120
    %v62 = vsel %vm60, %v48, 0
    %64 = vmatprep.subr.mxu0 0.0
    %65 = vmatpush1.msra.mxu0 %v49
    %66 = vmatprep.subr.mxu0 0.0
    %67 = vmatpush1.msra.mxu0 %v50
    %68 = vmatprep.subr.mxu0 0.0
    %69 = vmatpush1.msra.mxu0 %v51
    %70 = vmatprep.subr.mxu0 0.0
    %71 = vmatpush1.msra.mxu0 %v52
    %72 = vmatprep.subr.mxu0 0.0
    %73 = vmatpush1.msra.mxu0 0.0
    %74 = vmatprep.subr.mxu0 0.0
    %75 = vmatpush1.msra.mxu0 0.0
    %76 = vmatprep.subr.mxu0 0.0
    %77 = vmatpush1.msra.mxu0 0.0
    %78 = vmatprep.subr.mxu0 0.0
    %79 = vmatpush1.msra.mxu0 0.0
    %80 = vmatprep.subr.mxu0 0.0
    %81 = vmatpush1.msra.mxu0 0.0
    %82 = vmatprep.subr.mxu0 0.0
    %83 = vmatpush1.msra.mxu0 0.0
    %84 = vmatprep.subr.mxu0 0.0
    %85 = vmatpush1.msra.mxu0 0.0
    %86 = vmatprep.subr.mxu0 0.0
    %87 = vmatpush1.msra.mxu0 0.0
    %88 = vmatprep.subr.mxu0 0.0
    %89 = vmatpush1.msra.mxu0 0.0
    %90 = vmatprep.subr.mxu0 0.0
    %91 = vmatpush1.msra.mxu0 0.0
    %92 = vmatprep.subr.mxu0 0.0
    %93 = vmatpush1.msra.mxu0 0.0
    %94 = vmatprep.subr.mxu0 0.0
    %95 = vmatpush1.msra.mxu0 0.0
    %96 = vmatprep.subr.mxu0 0.0
    %97 = vmatpush1.msra.mxu0 0.0
    %98 = vmatprep.subr.mxu0 0.0
    %99 = vmatpush1.msra.mxu0 0.0
    %100 = vmatprep.subr.mxu0 0.0
    %101 = vmatpush1.msra.mxu0 0.0
    %102 = vmatprep.subr.mxu0 0.0
    %103 = vmatpush1.msra.mxu0 0.0
    %104 = vmatprep.subr.mxu0 0.0
    %105 = vmatpush1.msra.mxu0 0.0
    %106 = vmatprep.subr.mxu0 0.0
    %107 = vmatpush1.msra.mxu0 0.0
    %108 = vmatprep.subr.mxu0 0.0
    %109 = vmatpush1.msra.mxu0 0.0
    %110 = vmatprep.subr.mxu0 0.0
    %111 = vmatpush1.msra.mxu0 0.0
    %112 = vmatprep.subr.mxu0 0.0
    %113 = vmatpush1.msra.mxu0 0.0
    %114 = vmatprep.subr.mxu0 0.0
    %115 = vmatpush1.msra.mxu0 0.0
    %116 = vmatprep.subr.mxu0 0.0
    %117 = vmatpush1.msra.mxu0 0.0
    %118 = vmatprep.subr.mxu0 0.0
    %119 = vmatpush1.msra.mxu0 0.0
    %120 = vmatprep.subr.mxu0 0.0
    %121 = vmatpush1.msra.mxu0 0.0
    %122 = vmatprep.subr.mxu0 0.0
    %123 = vmatpush1.msra.mxu0 0.0
    %124 = vmatprep.subr.mxu0 0.0
    %125 = vmatpush1.msra.mxu0 0.0
    %126 = vmatprep.subr.mxu0 0.0
    %127 = vmatpush1.msra.mxu0 0.0
    %128 = vmatprep.mubr.f32.mxu0 0.0
    %129 = vmatmul.mubr.f32.gmra.mrb[0].mxu0 %v62
    %v130 = vpop.f32.mrb[0].mxu0
    %v131 = vadd.f32 %v58, %v130
    %v132 = vpop.f32.mrb[0].mxu0
    %133 = vdwg.mxu0
    %vm134 = vcmask 517120
    %135 = vst.msk [vmem:[%s3] sm:$0x3] %vm134, %v131
    // Predicated region
    $region18: #{dense_film.1} parent=1 // pred_check
      _
    $region19: #{dense_film.1} parent=1 // pred_check_branch
      %137 = sbr.rel (0) target = $region21
    $region20: #{dense_film.1} parent=1 // pred_region
      _
    $region21: #{dense_film.1} parent=1 // pred_fallthru
      _
    // Predicated region
    $region22: #{dense_film.1} parent=1 // pred_check
      _
    $region23: #{dense_film.1} parent=1 // pred_check_branch
      %139 = sbr.rel (0) target = $region25
    $region24: #{dense_film.1} parent=1 // pred_region
      _
    $region25: #{dense_film.1} parent=1 // pred_fallthru
      _
    %140 = vsyncpa [#allocation3], 1

</llo_original>
